<compile_context>
chip_gen: v7x
topology: tpu7x:2x2x1
jax: 0.10.0
libtpu: 0.0.40
codegen_flags: <defaults>
</compile_context>

<pallas_src>
import functools

import jax
import jax.numpy as jnp
from jax.experimental import pallas as pl
from jax.experimental.pallas import tpu as pltpu


def records_loss_kernel(idx_ref, ow_ref, os_ref, tgt_ref, itgt_ref, invb_ref,
                        conf_in_ref, loss_ref, conf_out_ref,
                        newt_vmem, sem, *, tb, inv_batch):
    """One batch block: loss partial + debiased pseudo-targets + row scatter."""
    del conf_in_ref  # aliased to conf_out_ref; only written, never read
    i = pl.program_id(0)
    eps = 1e-9

    ow = ow_ref[...].astype(jnp.float32)           # [TB, C] weak logits
    os_ = os_ref[...].astype(jnp.float32)          # [TB, C] strong logits
    tgt = tgt_ref[...].astype(jnp.float32)         # [TB, C] confidence[index]
    itgt = itgt_ref[...].astype(jnp.float32)       # [TB, C] init_confidence[index]
    inv_bias = invb_ref[...].astype(jnp.float32)   # [1, C] 1/(bias+eps)

    # --- one fused max/exp/sum pass per logit tensor -------------------------
    mw = jnp.max(ow, axis=1, keepdims=True)
    ew = jnp.exp(ow - mw)
    sw = jnp.sum(ew, axis=1, keepdims=True)
    ms = jnp.max(os_, axis=1, keepdims=True)
    es = jnp.exp(os_ - ms)
    ss = jnp.sum(es, axis=1, keepdims=True)

    pred_w = ew * (1.0 / sw)        # per-row exact reciprocal, broadcast multiply
    pred_s = es * (1.0 / ss)

    # --- supervised negative loss (two logs merged into one) -----------------
    neg = (tgt == 0.0).astype(jnp.float32)
    sup = neg * (-jnp.log((jnp.abs(1.0 - pred_w) + eps)
                          * (jnp.abs(1.0 - pred_s) + eps)))

    # --- both KL(batchmean) terms folded into per-row sums --------------------
    # sum_j t*logsoftmax(x)_j = sum_j t*x_j - (max(x)+log(sum exp)) * sum_j t
    log_sw = jnp.log(sw)
    log_ss = jnp.log(ss)
    safe_t = jnp.where(tgt > 0.0, tgt, 1.0)
    t_sum = jnp.sum(tgt, axis=1, keepdims=True)
    t_logt = jnp.sum(tgt * jnp.log(safe_t), axis=1, keepdims=True)
    t_ow = jnp.sum(tgt * ow, axis=1, keepdims=True)
    t_os = jnp.sum(tgt * os_, axis=1, keepdims=True)
    kl_rows = (2.0 * t_logt - t_ow - t_os
               + (mw + log_sw + ms + log_ss) * t_sum)

    block_loss = (jnp.sum(sup) + jnp.sum(kl_rows)) * inv_batch
    loss_ref[...] = jnp.reshape(block_loss, (1, 1))   # per-block partial

    # --- debiased pseudo-target update ----------------------------------------
    # softmax(x - log(bias+eps)) == normalize(exp(x - max(x)) / (bias+eps)):
    # reuse ew/es, no second exp/max pass.  All reciprocals are per-row exact.
    qw = ew * inv_bias
    qs = es * inv_bias
    pw2 = qw * (1.0 / jnp.sum(qw, axis=1, keepdims=True))
    ps2 = qs * (1.0 / jnp.sum(qs, axis=1, keepdims=True))

    revised = jnp.where(itgt > 0.0, 1.0, itgt)
    r = (revised * ps2) * (revised * pw2)
    r = r * (1.0 / (jnp.sum(r, axis=1, keepdims=True) + eps))
    r = jnp.sqrt(r)
    r = r * (1.0 / (jnp.sum(r, axis=1, keepdims=True) + eps))
    newt_vmem[...] = r.astype(newt_vmem.dtype)

    # --- fused row scatter: DMA each new row into confidence[index[row]] ------
    # (confidence is the aliased ANY-space output; rows are disjoint per block,
    #  so blocks never race.  TODO(synk): duplicate indices = "last DMA wins".)
    base = i * tb

    @pl.loop(0, tb)
    def _start(j):
        row = idx_ref[base + j]
        pltpu.make_async_copy(newt_vmem.at[pl.ds(j, 1), :],
                              conf_out_ref.at[pl.ds(row, 1), :],
                              sem.at[j]).start()

    @pl.loop(0, tb)
    def _wait(j):
        row = idx_ref[base + j]
        pltpu.make_async_copy(newt_vmem.at[pl.ds(j, 1), :],
                              conf_out_ref.at[pl.ds(row, 1), :],
                              sem.at[j]).wait()


def _pick_tb(batch, cap=256):
    """Largest batch tile <= cap that divides batch and is a multiple of 8
    (or the full batch).  Avoids ragged tails while staying sublane-aligned."""
    if batch <= cap:
        return batch
    for tb in range(cap - cap % 8, 7, -8):
        if batch % tb == 0:
            return tb
    # TODO(synk): batches with no multiple-of-8 divisor fall back to a single
    # full-batch block; add an in-kernel row mask if that block is too large.
    return batch


def records_forward(output_w, output_s, feat_w, feat_s,
                    confidence, init_confidence, feat_mean,
                    fc_w, fc_b, index, m=0.9, tb_cap=256):
    """Functional CORR_loss_RECORDS.forward (update_target=True branch).

    Returns (loss, new_confidence, new_feat_mean).
    feat_mean is [1, D]; fc_w is [D, C] (torch Linear weight transposed);
    fc_b is [1, C].  Logit / confidence inputs may be bf16; the kernel upcasts.
    """
    # TODO(synk): update_target is a static flag; only the True branch is done.
    eps = 1e-9
    B, C = output_w.shape
    N = confidence.shape[0]
    index = index.astype(jnp.int32)

    # Row gather (reads only B rows of [N, C]); plain-JAX glue, native dtype.
    target = confidence[index]
    init_target = init_confidence[index]

    # EMA feature mean + debias bias: 1xD and 1xDxC work, hoisted off the
    # kernel (an M=1 matmul would waste the MXU).  Zero-init feat_mean
    # reproduces the torch "feat_mean is None" branch.
    batch_mean = jnp.mean((feat_w.astype(jnp.float32)
                           + feat_s.astype(jnp.float32)) * 0.5,
                          axis=0, keepdims=True)
    new_feat_mean = m * feat_mean.astype(jnp.float32) + (1.0 - m) * batch_mean
    logits_bias = new_feat_mean @ fc_w.astype(jnp.float32) + fc_b.astype(jnp.float32)
    bias = jax.nn.softmax(logits_bias, axis=1)
    inv_bias = 1.0 / (bias + eps)                                  # [1, C] f32

    TB = _pick_tb(B, tb_cap)
    num_blocks = B // TB

    # VMEM budget: row inputs (double-buffered) + scratch + temp headroom.
    # Cap at 64 MiB so the setting is valid on v7x (64 MiB physical); this
    # also lifts v5e's 16 MiB default scoped limit for larger tiles.
    block_bytes = TB * C * 4
    vmem_limit = int(min(64 * 1024 * 1024,
                         max(32 * 1024 * 1024, 24 * block_bytes)))

    row_spec = pl.BlockSpec((TB, C), lambda i, idx: (i, 0))
    bias_spec = pl.BlockSpec((1, C), lambda i, idx: (0, 0))

    loss_parts, new_confidence = pl.pallas_call(
        functools.partial(records_loss_kernel, tb=TB, inv_batch=1.0 / B),
        out_shape=(jax.ShapeDtypeStruct((num_blocks, 1), jnp.float32),
                   jax.ShapeDtypeStruct((N, C), confidence.dtype)),
        grid_spec=pltpu.PrefetchScalarGridSpec(
            num_scalar_prefetch=1,
            grid=(num_blocks,),
            in_specs=[row_spec, row_spec, row_spec, row_spec, bias_spec,
                      pl.BlockSpec(memory_space=pl.ANY)],
            out_specs=(pl.BlockSpec((1, 1), lambda i, idx: (i, 0)),
                       pl.BlockSpec(memory_space=pl.ANY)),
            scratch_shapes=[pltpu.VMEM((TB, C), confidence.dtype),
                            pltpu.SemaphoreType.DMA((TB,))],
        ),
        # operands: (index, ow, os, tgt, itgt, inv_bias, confidence); alias the
        # confidence input (flat arg 6, counting the scalar-prefetch arg) to
        # the second output so untouched rows stay in place.
        input_output_aliases={6: 1},
        compiler_params=pltpu.CompilerParams(
            # TODO(synk): flip to "parallel" on v7x — per-block loss partials
            # and disjoint scatter rows already make that safe.
            dimension_semantics=("arbitrary",),
            vmem_limit_bytes=vmem_limit),
    )(index, output_w, output_s, target, init_target, inv_bias, confidence)

    loss = jnp.sum(loss_parts)
    return loss, new_confidence, new_feat_mean


def records_reference(output_w, output_s, feat_w, feat_s,
                      confidence, init_confidence, feat_mean,
                      fc_w, fc_b, index, m=0.9):
    """Pure-JAX mirror of the torch module (update_target=True)."""
    eps = 1e-9
    B = output_w.shape[0]
    pred_s = jax.nn.softmax(output_s, axis=1)
    pred_w = jax.nn.softmax(output_w, axis=1)
    target = confidence[index]
    neg = (target == 0.0).astype(jnp.float32)
    sup = neg * (-jnp.log(jnp.abs(1.0 - pred_w) + eps)
                 - jnp.log(jnp.abs(1.0 - pred_s) + eps))
    sup_loss1 = jnp.sum(sup) / B

    def kl_batchmean(logp, t):
        safe_t = jnp.where(t > 0.0, t, 1.0)
        return jnp.sum(jnp.where(t > 0.0, t * (jnp.log(safe_t) - logp), 0.0)) / B

    con = (kl_batchmean(jax.nn.log_softmax(output_w, axis=1), target)
           + kl_batchmean(jax.nn.log_softmax(output_s, axis=1), target))
    loss = sup_loss1 + con

    new_fm = m * feat_mean + (1.0 - m) * jnp.mean((feat_w + feat_s) / 2.0,
                                                  axis=0, keepdims=True)
    bias = jax.nn.softmax(new_fm @ fc_w + fc_b, axis=1)
    logb = jnp.log(bias + eps)
    ps = jax.nn.softmax(output_s - logb, axis=1)
    pw = jax.nn.softmax(output_w - logb, axis=1)
    it = init_confidence[index]
    revised = jnp.where(it > 0.0, 1.0, it)
    r = (revised * ps) * (revised * pw)
    r = r / (jnp.sum(r, axis=1, keepdims=True) + eps)
    r = jnp.sqrt(r)
    r = r / (jnp.sum(r, axis=1, keepdims=True) + eps)
    new_conf = confidence.at[index].set(r)
    return loss, new_conf, new_fm


if __name__ == "__main__":
    # Small shapes: dataset N=64, batch B=8, classes C=16, feat dim D=32.
    N, B, C, D = 64, 8, 16, 32
    key = jax.random.PRNGKey(0)
    k1, k2, k3, k4, k5, k6, k7 = jax.random.split(key, 7)

    output_w = jax.random.normal(k1, (B, C), jnp.float32)
    output_s = jax.random.normal(k2, (B, C), jnp.float32)
    feat_w = jax.random.normal(k3, (B, D), jnp.float32)
    feat_s = jax.random.normal(k4, (B, D), jnp.float32)

    # Partial-label confidence matrix: uniform over a random candidate set.
    cand = (jax.random.uniform(k5, (N, C)) < 0.3).astype(jnp.float32)
    cand = cand.at[jnp.arange(N), jax.random.randint(k6, (N,), 0, C)].set(1.0)
    confidence = cand / jnp.sum(cand, axis=1, keepdims=True)
    init_confidence = confidence

    feat_mean = jnp.zeros((1, D), jnp.float32)          # torch "None" branch
    fc_w = jax.random.normal(k7, (D, C), jnp.float32) * 0.05   # [D, C]
    fc_b = jnp.zeros((1, C), jnp.float32)

    # Unique indices into the dataset for this batch (torch in-place row
    # assignment semantics assume no duplicate index entries).
    index = jax.random.permutation(jax.random.PRNGKey(123), N)[:B]

    loss, new_conf, new_fm = records_forward(
        output_w, output_s, feat_w, feat_s,
        confidence, init_confidence, feat_mean, fc_w, fc_b, index, m=0.9)
    jax.block_until_ready((loss, new_conf, new_fm))

    ref_loss, ref_conf, ref_fm = records_reference(
        output_w, output_s, feat_w, feat_s,
        confidence, init_confidence, feat_mean, fc_w, fc_b, index, m=0.9)

    assert jnp.isfinite(loss)
    assert new_conf.shape == (N, C) and new_fm.shape == (1, D)
    assert jnp.allclose(loss, ref_loss, rtol=1e-3, atol=1e-3)
    assert jnp.allclose(new_fm, ref_fm, rtol=1e-5, atol=1e-6)
    assert jnp.allclose(new_conf, ref_conf, rtol=1e-3, atol=1e-3)
    # Rows not in `index` must be bit-identical (aliased in-place scatter).
    untouched = jnp.ones((N,), bool).at[index].set(False)
    assert bool(jnp.all(new_conf[untouched] == confidence[untouched]))
    print("KERNEL_OK")
</pallas_src>

<mosaic_0001>
module attributes {stable_mosaic.version = 11 : i64} {
  func.func @records_loss_kernel(%arg0: i32, %arg1: memref<8xi32, #tpu.memory_space<smem>>, %arg2: memref<8x16xf32, #tpu.memory_space<vmem>>, %arg3: memref<8x16xf32, #tpu.memory_space<vmem>>, %arg4: memref<8x16xf32, #tpu.memory_space<vmem>>, %arg5: memref<8x16xf32, #tpu.memory_space<vmem>>, %arg6: memref<1x16xf32, #tpu.memory_space<vmem>>, %arg7: memref<64x16xf32, #tpu.memory_space<any>>, %arg8: memref<1x1xf32, #tpu.memory_space<vmem>>, %arg9: memref<64x16xf32, #tpu.memory_space<any>>, %arg10: memref<8x16xf32, #tpu.memory_space<vmem>>, %arg11: memref<8x!tpu.dma_semaphore, #tpu.memory_space<semaphore_mem>>) attributes {dimension_semantics = [#tpu.dimension_semantics<arbitrary>], iteration_bounds = array<i64: 1>, scalar_prefetch = 1 : i64, scratch_operands = 2 : i64, tpu.core_type = #tpu.core_type<tc>, window_params = [{transform_indices = @transform_0, window_bounds = array<i64: 8, 16>}, {transform_indices = @transform_1, window_bounds = array<i64: 8, 16>}, {transform_indices = @transform_2, window_bounds = array<i64: 8, 16>}, {transform_indices = @transform_3, window_bounds = array<i64: 8, 16>}, {pipeline_mode = #tpu.pipeline_mode<synchronous>, transform_indices = @transform_4, window_bounds = array<i64: 1, 16>}, {}, {transform_indices = @transform_6, window_bounds = array<i64: 1, 1>}, {}]} {
    %c0 = arith.constant 0 : index
    %c0_0 = arith.constant 0 : index
    %0 = vector.load %arg2[%c0, %c0_0] : memref<8x16xf32, #tpu.memory_space<vmem>>, vector<8x16xf32>
    %c0_1 = arith.constant 0 : index
    %c0_2 = arith.constant 0 : index
    %1 = vector.load %arg3[%c0_1, %c0_2] : memref<8x16xf32, #tpu.memory_space<vmem>>, vector<8x16xf32>
    %c0_3 = arith.constant 0 : index
    %c0_4 = arith.constant 0 : index
    %2 = vector.load %arg4[%c0_3, %c0_4] : memref<8x16xf32, #tpu.memory_space<vmem>>, vector<8x16xf32>
    %c0_5 = arith.constant 0 : index
    %c0_6 = arith.constant 0 : index
    %3 = vector.load %arg5[%c0_5, %c0_6] : memref<8x16xf32, #tpu.memory_space<vmem>>, vector<8x16xf32>
    %c0_7 = arith.constant 0 : index
    %c0_8 = arith.constant 0 : index
    %4 = vector.load %arg6[%c0_7, %c0_8] : memref<1x16xf32, #tpu.memory_space<vmem>>, vector<1x16xf32>
    %cst = arith.constant dense<0xFF800000> : vector<8xf32>
    %5 = vector.multi_reduction <maximumf>, %0, %cst [1] : vector<8x16xf32> to vector<8xf32>
    %6 = vector.shape_cast %5 : vector<8xf32> to vector<8x1xf32>
    %7 = vector.broadcast %6 : vector<8x1xf32> to vector<8x16xf32>
    %8 = arith.subf %0, %7 : vector<8x16xf32>
    %9 = math.exp %8 : vector<8x16xf32>
    %cst_9 = arith.constant dense<0.000000e+00> : vector<8xf32>
    %10 = vector.multi_reduction <add>, %9, %cst_9 [1] : vector<8x16xf32> to vector<8xf32>
    %11 = vector.shape_cast %10 : vector<8xf32> to vector<8x1xf32>
    %cst_10 = arith.constant dense<0xFF800000> : vector<8xf32>
    %12 = vector.multi_reduction <maximumf>, %1, %cst_10 [1] : vector<8x16xf32> to vector<8xf32>
    %13 = vector.shape_cast %12 : vector<8xf32> to vector<8x1xf32>
    %14 = vector.broadcast %13 : vector<8x1xf32> to vector<8x16xf32>
    %15 = arith.subf %1, %14 : vector<8x16xf32>
    %16 = math.exp %15 : vector<8x16xf32>
    %cst_11 = arith.constant dense<0.000000e+00> : vector<8xf32>
    %17 = vector.multi_reduction <add>, %16, %cst_11 [1] : vector<8x16xf32> to vector<8xf32>
    %18 = vector.shape_cast %17 : vector<8xf32> to vector<8x1xf32>
    %cst_12 = arith.constant 1.000000e+00 : f32
    %19 = vector.broadcast %cst_12 : f32 to vector<8x1xf32>
    %20 = arith.divf %19, %11 : vector<8x1xf32>
    %21 = vector.broadcast %20 : vector<8x1xf32> to vector<8x16xf32>
    %22 = arith.mulf %9, %21 : vector<8x16xf32>
    %cst_13 = arith.constant 1.000000e+00 : f32
    %23 = vector.broadcast %cst_13 : f32 to vector<8x1xf32>
    %24 = arith.divf %23, %18 : vector<8x1xf32>
    %25 = vector.broadcast %24 : vector<8x1xf32> to vector<8x16xf32>
    %26 = arith.mulf %16, %25 : vector<8x16xf32>
    %cst_14 = arith.constant 0.000000e+00 : f32
    %27 = vector.broadcast %cst_14 : f32 to vector<8x16xf32>
    %28 = arith.cmpf oeq, %2, %27 : vector<8x16xf32>
    %29 = arith.extui %28 : vector<8x16xi1> to vector<8x16xi32>
    %30 = arith.sitofp %29 : vector<8x16xi32> to vector<8x16xf32>
    %cst_15 = arith.constant 1.000000e+00 : f32
    %31 = vector.broadcast %cst_15 : f32 to vector<8x16xf32>
    %32 = arith.subf %31, %22 : vector<8x16xf32>
    %33 = math.absf %32 : vector<8x16xf32>
    %cst_16 = arith.constant 9.99999971E-10 : f32
    %34 = vector.broadcast %cst_16 : f32 to vector<8x16xf32>
    %35 = arith.addf %33, %34 : vector<8x16xf32>
    %cst_17 = arith.constant 1.000000e+00 : f32
    %36 = vector.broadcast %cst_17 : f32 to vector<8x16xf32>
    %37 = arith.subf %36, %26 : vector<8x16xf32>
    %38 = math.absf %37 : vector<8x16xf32>
    %cst_18 = arith.constant 9.99999971E-10 : f32
    %39 = vector.broadcast %cst_18 : f32 to vector<8x16xf32>
    %40 = arith.addf %38, %39 : vector<8x16xf32>
    %41 = arith.mulf %35, %40 : vector<8x16xf32>
    %42 = math.log %41 : vector<8x16xf32>
    %cst_19 = arith.constant 0.000000e+00 : f32
    %43 = vector.broadcast %cst_19 : f32 to vector<8x16xf32>
    %44 = arith.subf %43, %42 : vector<8x16xf32>
    %45 = arith.mulf %30, %44 : vector<8x16xf32>
    %46 = math.log %11 : vector<8x1xf32>
    %47 = math.log %18 : vector<8x1xf32>
    %cst_20 = arith.constant 0.000000e+00 : f32
    %48 = vector.broadcast %cst_20 : f32 to vector<8x16xf32>
    %49 = arith.cmpf ogt, %2, %48 : vector<8x16xf32>
    %cst_21 = arith.constant 1.000000e+00 : f32
    %50 = vector.broadcast %cst_21 : f32 to vector<8x16xf32>
    %51 = arith.select %49, %2, %50 : vector<8x16xi1>, vector<8x16xf32>
    %cst_22 = arith.constant dense<0.000000e+00> : vector<8xf32>
    %52 = vector.multi_reduction <add>, %2, %cst_22 [1] : vector<8x16xf32> to vector<8xf32>
    %53 = vector.shape_cast %52 : vector<8xf32> to vector<8x1xf32>
    %54 = math.log %51 : vector<8x16xf32>
    %55 = arith.mulf %2, %54 : vector<8x16xf32>
    %cst_23 = arith.constant dense<0.000000e+00> : vector<8xf32>
    %56 = vector.multi_reduction <add>, %55, %cst_23 [1] : vector<8x16xf32> to vector<8xf32>
    %57 = vector.shape_cast %56 : vector<8xf32> to vector<8x1xf32>
    %58 = arith.mulf %2, %0 : vector<8x16xf32>
    %cst_24 = arith.constant dense<0.000000e+00> : vector<8xf32>
    %59 = vector.multi_reduction <add>, %58, %cst_24 [1] : vector<8x16xf32> to vector<8xf32>
    %60 = vector.shape_cast %59 : vector<8xf32> to vector<8x1xf32>
    %61 = arith.mulf %2, %1 : vector<8x16xf32>
    %cst_25 = arith.constant dense<0.000000e+00> : vector<8xf32>
    %62 = vector.multi_reduction <add>, %61, %cst_25 [1] : vector<8x16xf32> to vector<8xf32>
    %63 = vector.shape_cast %62 : vector<8xf32> to vector<8x1xf32>
    %cst_26 = arith.constant 2.000000e+00 : f32
    %64 = vector.broadcast %cst_26 : f32 to vector<8x1xf32>
    %65 = arith.mulf %64, %57 : vector<8x1xf32>
    %66 = arith.subf %65, %60 : vector<8x1xf32>
    %67 = arith.subf %66, %63 : vector<8x1xf32>
    %68 = arith.addf %6, %46 : vector<8x1xf32>
    %69 = arith.addf %68, %13 : vector<8x1xf32>
    %70 = arith.addf %69, %47 : vector<8x1xf32>
    %71 = arith.mulf %70, %53 : vector<8x1xf32>
    %72 = arith.addf %67, %71 : vector<8x1xf32>
    %73 = vector.shape_cast %45 : vector<8x16xf32> to vector<1x8x16xf32>
    %cst_27 = arith.constant dense<0.000000e+00> : vector<1xf32>
    %74 = vector.multi_reduction <add>, %73, %cst_27 [1, 2] : vector<1x8x16xf32> to vector<1xf32>
    %75 = vector.shape_cast %74 : vector<1xf32> to vector<1x1x1xf32>
    %76 = vector.extract %75[0, 0, 0] : f32 from vector<1x1x1xf32>
    %77 = vector.shape_cast %72 : vector<8x1xf32> to vector<1x8x1xf32>
    %cst_28 = arith.constant dense<0.000000e+00> : vector<1xf32>
    %78 = vector.multi_reduction <add>, %77, %cst_28 [1, 2] : vector<1x8x1xf32> to vector<1xf32>
    %79 = vector.shape_cast %78 : vector<1xf32> to vector<1x1x1xf32>
    %80 = vector.extract %79[0, 0, 0] : f32 from vector<1x1x1xf32>
    %81 = arith.addf %76, %80 : f32
    %cst_29 = arith.constant 1.250000e-01 : f32
    %82 = arith.mulf %81, %cst_29 : f32
    %83 = vector.broadcast %82 : f32 to vector<1x1xf32>
    %c0_30 = arith.constant 0 : index
    %c0_31 = arith.constant 0 : index
    %84 = vector.load %arg8[%c0_30, %c0_31] : memref<1x1xf32, #tpu.memory_space<vmem>>, vector<1x1xf32>
    tpu.vector_store %arg8[%c0_30, %c0_31], %83 {strides = array<i32>} : memref<1x1xf32, #tpu.memory_space<vmem>>, vector<1x1xf32>,
    %85 = vector.broadcast %4 : vector<1x16xf32> to vector<8x16xf32>
    %86 = arith.mulf %9, %85 : vector<8x16xf32>
    %87 = vector.broadcast %4 : vector<1x16xf32> to vector<8x16xf32>
    %88 = arith.mulf %16, %87 : vector<8x16xf32>
    %cst_32 = arith.constant dense<0.000000e+00> : vector<8xf32>
    %89 = vector.multi_reduction <add>, %86, %cst_32 [1] : vector<8x16xf32> to vector<8xf32>
    %90 = vector.shape_cast %89 : vector<8xf32> to vector<8x1xf32>
    %cst_33 = arith.constant 1.000000e+00 : f32
    %91 = vector.broadcast %cst_33 : f32 to vector<8x1xf32>
    %92 = arith.divf %91, %90 : vector<8x1xf32>
    %93 = vector.broadcast %92 : vector<8x1xf32> to vector<8x16xf32>
    %94 = arith.mulf %86, %93 : vector<8x16xf32>
    %cst_34 = arith.constant dense<0.000000e+00> : vector<8xf32>
    %95 = vector.multi_reduction <add>, %88, %cst_34 [1] : vector<8x16xf32> to vector<8xf32>
    %96 = vector.shape_cast %95 : vector<8xf32> to vector<8x1xf32>
    %cst_35 = arith.constant 1.000000e+00 : f32
    %97 = vector.broadcast %cst_35 : f32 to vector<8x1xf32>
    %98 = arith.divf %97, %96 : vector<8x1xf32>
    %99 = vector.broadcast %98 : vector<8x1xf32> to vector<8x16xf32>
    %100 = arith.mulf %88, %99 : vector<8x16xf32>
    %cst_36 = arith.constant 0.000000e+00 : f32
    %101 = vector.broadcast %cst_36 : f32 to vector<8x16xf32>
    %102 = arith.cmpf ogt, %3, %101 : vector<8x16xf32>
    %cst_37 = arith.constant 1.000000e+00 : f32
    %103 = vector.broadcast %cst_37 : f32 to vector<8x16xf32>
    %104 = arith.select %102, %103, %3 : vector<8x16xi1>, vector<8x16xf32>
    %105 = arith.mulf %104, %100 : vector<8x16xf32>
    %106 = arith.mulf %104, %94 : vector<8x16xf32>
    %107 = arith.mulf %105, %106 : vector<8x16xf32>
    %cst_38 = arith.constant dense<0.000000e+00> : vector<8xf32>
    %108 = vector.multi_reduction <add>, %107, %cst_38 [1] : vector<8x16xf32> to vector<8xf32>
    %109 = vector.shape_cast %108 : vector<8xf32> to vector<8x1xf32>
    %cst_39 = arith.constant 9.99999971E-10 : f32
    %110 = vector.broadcast %cst_39 : f32 to vector<8x1xf32>
    %111 = arith.addf %109, %110 : vector<8x1xf32>
    %cst_40 = arith.constant 1.000000e+00 : f32
    %112 = vector.broadcast %cst_40 : f32 to vector<8x1xf32>
    %113 = arith.divf %112, %111 : vector<8x1xf32>
    %114 = vector.broadcast %113 : vector<8x1xf32> to vector<8x16xf32>
    %115 = arith.mulf %107, %114 : vector<8x16xf32>
    %116 = math.sqrt %115 : vector<8x16xf32>
    %cst_41 = arith.constant dense<0.000000e+00> : vector<8xf32>
    %117 = vector.multi_reduction <add>, %116, %cst_41 [1] : vector<8x16xf32> to vector<8xf32>
    %118 = vector.shape_cast %117 : vector<8xf32> to vector<8x1xf32>
    %cst_42 = arith.constant 9.99999971E-10 : f32
    %119 = vector.broadcast %cst_42 : f32 to vector<8x1xf32>
    %120 = arith.addf %118, %119 : vector<8x1xf32>
    %cst_43 = arith.constant 1.000000e+00 : f32
    %121 = vector.broadcast %cst_43 : f32 to vector<8x1xf32>
    %122 = arith.divf %121, %120 : vector<8x1xf32>
    %123 = vector.broadcast %122 : vector<8x1xf32> to vector<8x16xf32>
    %124 = arith.mulf %116, %123 : vector<8x16xf32>
    %c0_44 = arith.constant 0 : index
    %c0_45 = arith.constant 0 : index
    %125 = vector.load %arg10[%c0_44, %c0_45] : memref<8x16xf32, #tpu.memory_space<vmem>>, vector<8x16xf32>
    tpu.vector_store %arg10[%c0_44, %c0_45], %124 {strides = array<i32>} : memref<8x16xf32, #tpu.memory_space<vmem>>, vector<8x16xf32>,
    %c8_i32 = arith.constant 8 : i32
    %126 = arith.muli %arg0, %c8_i32 : i32
    %c0_i32 = arith.constant 0 : i32
    %c8_i32_46 = arith.constant 8 : i32
    %127 = arith.addi %c0_i32, %c8_i32_46 : i32
    %c1_i32 = arith.constant 1 : i32
    scf.for %arg12 = %c0_i32 to %127 step %c1_i32  : i32 {
      %c1_i32_52 = arith.constant 1 : i32
      %129 = arith.muli %arg12, %c1_i32_52 : i32
      %c0_i32_53 = arith.constant 0 : i32
      %130 = arith.addi %c0_i32_53, %129 : i32
      %131 = arith.addi %126, %130 : i32
      %132 = arith.index_cast %131 : i32 to index
      %133 = memref.load %arg1[%132] : memref<8xi32, #tpu.memory_space<smem>>
      %c0_i32_54 = arith.constant 0 : i32
      %134 = tpu.memref_slice %arg10[%130, %c0_i32_54] : memref<8x16xf32, #tpu.memory_space<vmem>> -> memref<1x16xf32, #tpu.memory_space<vmem>>
      %c0_i32_55 = arith.constant 0 : i32
      %135 = tpu.memref_slice %arg9[%133, %c0_i32_55] : memref<64x16xf32, #tpu.memory_space<any>> -> memref<1x16xf32, #tpu.memory_space<any>>
      %136 = tpu.memref_slice %arg11[%130] : memref<8x!tpu.dma_semaphore, #tpu.memory_space<semaphore_mem>> -> memref<1x!tpu.dma_semaphore, #tpu.memory_space<semaphore_mem>>
      %137 = tpu.memref_squeeze %136 : memref<1x!tpu.dma_semaphore, #tpu.memory_space<semaphore_mem>> -> memref<!tpu.dma_semaphore, #tpu.memory_space<semaphore_mem>>
      tpu.enqueue_dma source(%134 : memref<1x16xf32, #tpu.memory_space<vmem>>) target(%135 : memref<1x16xf32, #tpu.memory_space<any>>) target_semaphore(%137 : memref<!tpu.dma_semaphore, #tpu.memory_space<semaphore_mem>>)
    }
    %c8_i32_47 = arith.constant 8 : i32
    %c0_i32_48 = arith.constant 0 : i32
    %c8_i32_49 = arith.constant 8 : i32
    %128 = arith.addi %c0_i32_48, %c8_i32_49 : i32
    %c1_i32_50 = arith.constant 1 : i32
    scf.for %arg12 = %c0_i32_48 to %128 step %c1_i32_50  : i32 {
      %c1_i32_52 = arith.constant 1 : i32
      %129 = arith.muli %arg12, %c1_i32_52 : i32
      %c0_i32_53 = arith.constant 0 : i32
      %130 = arith.addi %c0_i32_53, %129 : i32
      %131 = arith.addi %126, %130 : i32
      %132 = arith.index_cast %131 : i32 to index
      %133 = memref.load %arg1[%132] : memref<8xi32, #tpu.memory_space<smem>>
      %c0_i32_54 = arith.constant 0 : i32
      %134 = tpu.memref_slice %arg10[%130, %c0_i32_54] : memref<8x16xf32, #tpu.memory_space<vmem>> -> memref<1x16xf32, #tpu.memory_space<vmem>>
      %c0_i32_55 = arith.constant 0 : i32
      %135 = tpu.memref_slice %arg9[%133, %c0_i32_55] : memref<64x16xf32, #tpu.memory_space<any>> -> memref<1x16xf32, #tpu.memory_space<any>>
      %136 = tpu.memref_slice %arg11[%130] : memref<8x!tpu.dma_semaphore, #tpu.memory_space<semaphore_mem>> -> memref<1x!tpu.dma_semaphore, #tpu.memory_space<semaphore_mem>>
      %137 = tpu.memref_squeeze %136 : memref<1x!tpu.dma_semaphore, #tpu.memory_space<semaphore_mem>> -> memref<!tpu.dma_semaphore, #tpu.memory_space<semaphore_mem>>
      tpu.wait_dma2 semaphore(%137 : memref<!tpu.dma_semaphore, #tpu.memory_space<semaphore_mem>>) src(%134 : memref<1x16xf32, #tpu.memory_space<vmem>>) dst(%135 : memref<1x16xf32, #tpu.memory_space<any>>)
    }
    %c8_i32_51 = arith.constant 8 : i32
    return
  }
  func.func @transform_0(%arg0: i32, %arg1: memref<8xi32, #tpu.memory_space<smem>>) -> (i32, i32) {
    %c0_i32 = arith.constant 0 : i32
    %c0_i32_0 = arith.constant 0 : i32
    return %arg0, %c0_i32 : i32, i32
  }
  func.func @transform_1(%arg0: i32, %arg1: memref<8xi32, #tpu.memory_space<smem>>) -> (i32, i32) {
    %c0_i32 = arith.constant 0 : i32
    %c0_i32_0 = arith.constant 0 : i32
    return %arg0, %c0_i32 : i32, i32
  }
  func.func @transform_2(%arg0: i32, %arg1: memref<8xi32, #tpu.memory_space<smem>>) -> (i32, i32) {
    %c0_i32 = arith.constant 0 : i32
    %c0_i32_0 = arith.constant 0 : i32
    return %arg0, %c0_i32 : i32, i32
  }
  func.func @transform_3(%arg0: i32, %arg1: memref<8xi32, #tpu.memory_space<smem>>) -> (i32, i32) {
    %c0_i32 = arith.constant 0 : i32
    %c0_i32_0 = arith.constant 0 : i32
    return %arg0, %c0_i32 : i32, i32
  }
  func.func @transform_4(%arg0: i32, %arg1: memref<8xi32, #tpu.memory_space<smem>>) -> (i32, i32) {
    %c0_i32 = arith.constant 0 : i32
    %c0_i32_0 = arith.constant 0 : i32
    %c0_i32_1 = arith.constant 0 : i32
    return %c0_i32, %c0_i32_0 : i32, i32
  }
  func.func @transform_6(%arg0: i32, %arg1: memref<8xi32, #tpu.memory_space<smem>>) -> (i32, i32) {
    %c0_i32 = arith.constant 0 : i32
    %c0_i32_0 = arith.constant 0 : i32
    return %arg0, %c0_i32 : i32, i32
  }
}

</mosaic_0001>

<llo_original>
// kernel: tpu_custom_call.1
$region0: #{tpu_custom_call.1}
  #allocation0 [shape = 'u32[]', space=smem, size = 0x4, offset = 0x4, fixed_abs, tag = 'smem constant byte address 0x4 - core index']
  #allocation1 [shape = 'u32[144,128]{1,0:T(1,128)}', space=vmem, size = 0x12000, scoped, tag = 'internal scratch']
  #allocation2 [shape = 'f32[8,16]{1,0:T(8,128)}', space=vmem, size = 0x1000, scoped, tag = 'scratch operand']
  #allocation3 [shape = 's32[8]{0}', space=sflag, size = 0x20, scoped, tag = 'scratch operand']
  #allocation4 [shape = 's32[1]{0}', space=sflag, size = 0x4, scoped, tag = 'scoped memory for tpu_custom_call.1']
  #allocation5 [shape = 'u8[512]{0}', space=smem, size = 0x200, scoped, tag = 'prefetched SMEM operand 0']
  #allocation8 [shape = 's32[]', space=sflag, size = 0x4, offset = 0, fixed_abs, tag = 'sflag constant byte address 0x0 - dummy sync flag']
  %s0 = inlined_call_operand.vmem [shape: s32[8], index: 0, kind: input, shape index: {}]
  %s1 = inlined_call_operand.vmem [shape: f32[8,16], index: 1, kind: input, shape index: {}]
  %s2 = inlined_call_operand.vmem [shape: f32[8,16], index: 2, kind: input, shape index: {}]
  %s3 = inlined_call_operand.vmem [shape: f32[8,16], index: 3, kind: input, shape index: {}]
  %s4 = inlined_call_operand.vmem [shape: f32[8,16], index: 4, kind: input, shape index: {}]
  %s5 = inlined_call_operand.vmem [shape: f32[1,16], index: 5, kind: input, shape index: {}]
  %s6 = inlined_call_operand.vmem [shape: f32[64,16], index: 6, kind: input, shape index: {}, may-alias: {6,8}]
  %s7 = inlined_call_operand.hbm [shape: f32[1,1], index: 7, kind: output, shape index: {0}]
  %s8 = inlined_call_operand.vmem [shape: f32[64,16], index: 8, kind: output, shape index: {1}, may-alias: {6,8}]
  %9 = xla_tuple %s7, %s8
  %s10 = sld [smem:[#allocation0]]
  $region74: #{tpu_custom_call.1} parent=0
    _
  %s12 = ssub.s32 1, %s10
  %s13 = scalar_select 0, %s12, %s10
  %s14 = sshll.u32 %s0, 4
  %s15 = int_to_ptr.vmem [resolvable:$true] %s14
  %17 = dma.vmem_to_smem %s15, 16, [#allocation5], [#allocation4]
  %18 = dma.done [#allocation4], 16
  %19 = sfence
  $region1: #{tpu_custom_call.1} parent=0
    #allocation6 [shape = 'u8[512]{0}', space=vmem, size = 0x400, scoped, tag = 'output window, operand 0, single buffered']
    #allocation7 [shape = 's32[1]{0}', space=sflag, size = 0x4, scoped, tag = 'scoped memory for tpu_custom_call.1']
    %20 = vsyncpa [#allocation7], 0
    // Predicated region
    $region2: #{tpu_custom_call.1} parent=1 // pred_check
      _
    $region3: #{tpu_custom_call.1} parent=1 // pred_check_branch
      %22 = sbr.rel (0) target = $region5
    $region4: #{tpu_custom_call.1} parent=1 // pred_region
      _
    $region5: #{tpu_custom_call.1} parent=1 // pred_fallthru
      _
    // Predicated region
    $region6: #{tpu_custom_call.1} parent=1 // pred_check
      _
    $region7: #{tpu_custom_call.1} parent=1 // pred_check_branch
      %24 = sbr.rel (0) target = $region9
    $region8: #{tpu_custom_call.1} parent=1 // pred_region
      _
    $region9: #{tpu_custom_call.1} parent=1 // pred_fallthru
      _
    // Predicated region
    $region10: #{tpu_custom_call.1} parent=1 // pred_check
      _
    $region11: #{tpu_custom_call.1} parent=1 // pred_check_branch
      %26 = sbr.rel (0) target = $region13
    $region12: #{tpu_custom_call.1} parent=1 // pred_region
      _
    $region13: #{tpu_custom_call.1} parent=1 // pred_fallthru
      _
    // Predicated region
    $region14: #{tpu_custom_call.1} parent=1 // pred_check
      _
    $region15: #{tpu_custom_call.1} parent=1 // pred_check_branch
      %28 = sbr.rel (0) target = $region17
    $region16: #{tpu_custom_call.1} parent=1 // pred_region
      _
    $region17: #{tpu_custom_call.1} parent=1 // pred_fallthru
      _
    // Predicated region
    $region18: #{tpu_custom_call.1} parent=1 // pred_check
      _
    $region19: #{tpu_custom_call.1} parent=1 // pred_check_branch
      %30 = sbr.rel (0) target = $region21
    $region20: #{tpu_custom_call.1} parent=1 // pred_region
      _
    $region21: #{tpu_custom_call.1} parent=1 // pred_fallthru
      _
    %v31 = vld [vmem:[%s1] sm:$0xff]
    %v32 = vld [vmem:[%s2] sm:$0xff]
    %v33 = vld [vmem:[%s3] sm:$0xff]
    %v34 = vld [vmem:[%s4] sm:$0xff]
    %v35 = vld [vmem:[%s5] sm:$0x1]
    %vm36 = vcmask 130048
    %v37 = vsel %vm36, %v31, -inf
    %38 = vmax.xlane.f32.xlu0 %v37
    %v39 = vpop.xlane.xlu0 %38
    %v40 = vsub.f32 %v31, %v39
    %v41 = vmul.f32 %v40, 1.442695
    %v42 = vpow.pop %v41
    %v43 = vsel %vm36, %v42, 0.0
    %44 = vadd.xlane.f32.xlu0 %v43
    %v45 = vpop.xlane.xlu0 %44
    %v46 = vsel %vm36, %v32, -inf
    %47 = vmax.xlane.f32.xlu0 %v46
    %v48 = vpop.xlane.xlu0 %47
    %v49 = vsub.f32 %v32, %v48
    %v50 = vmul.f32 %v49, 1.442695
    %v51 = vpow.pop %v50
    %v52 = vsel %vm36, %v51, 0.0
    %53 = vadd.xlane.f32.xlu0 %v52
    %v54 = vpop.xlane.xlu0 %53
    %v55 = vrcp.pop %v45
    %v56 = vmul.f32 1.0, %v55
    %v57 = vmul.f32 %v42, %v56
    %v58 = vrcp.pop %v54
    %v59 = vmul.f32 1.0, %v58
    %v60 = vmul.f32 %v51, %v59
    %vm61 = vcmp.eq.f32.partialorder %v33, 0.0
    %v62 = vsel %vm61, 1, 0
    %v63 = vcvt.s32.f32 %v62
    %v64 = vsub.f32 1.0, %v57
    %v65 = vand.u32 2147483647, %v64
    %v66 = vadd.f32 %v65, 1e-09
    %v67 = vsub.f32 1.0, %v60
    %v68 = vand.u32 2147483647, %v67
    %v69 = vadd.f32 %v68, 1e-09
    %v70 = vmul.f32 %v66, %v69
    %v71 = vlog2.pop %v70
    %v72 = vmul.f32 %v71, 0.6931472
    %v73 = vsub.f32 0.0, %v72
    %v74 = vmul.f32 %v63, %v73
    %v75 = vlog2.pop %v45
    %v76 = vmul.f32 %v75, 0.6931472
    %v77 = vlog2.pop %v54
    %v78 = vmul.f32 %v77, 0.6931472
    %vm79 = vcmp.gt.f32.partialorder %v33, 0.0
    %v80 = vsel %vm79, %v33, 1.0
    %v81 = vsel %vm36, %v33, 0.0
    %82 = vadd.xlane.f32.xlu0 %v81
    %v83 = vpop.xlane.xlu0 %82
    %v84 = vlog2.pop %v80
    %v85 = vmul.f32 %v84, 0.6931472
    %v86 = vmul.f32 %v33, %v85
    %v87 = vsel %vm36, %v86, 0.0
    %88 = vadd.xlane.f32.xlu0 %v87
    %v89 = vpop.xlane.xlu0 %88
    %v90 = vmul.f32 %v33, %v31
    %v91 = vsel %vm36, %v90, 0.0
    %92 = vadd.xlane.f32.xlu0 %v91
    %v93 = vpop.xlane.xlu0 %92
    %v94 = vmul.f32 %v33, %v32
    %v95 = vsel %vm36, %v94, 0.0
    %96 = vadd.xlane.f32.xlu0 %v95
    %v97 = vpop.xlane.xlu0 %96
    %v98 = vmul.f32 %v89, 2.0
    %v99 = vsub.f32 %v98, %v93
    %v100 = vsub.f32 %v99, %v97
    %v101 = vadd.f32 %v39, %v76
    %v102 = vadd.f32 %v101, %v48
    %v103 = vadd.f32 %v102, %v78
    %v104 = vmul.f32 %v103, %v83
    %v105 = vadd.f32 %v100, %v104
    %v106 = vsel %vm36, %v74, 0.0
    %107 = vadd.xlane.f32.xlu0 %v106
    %v108 = vpop.xlane.xlu0 %107
    %v109 = vrot.slane %v108, 4
    %v110 = vadd.f32 %v108, %v109
    %v111 = vrot.slane %v110, 2
    %v112 = vadd.f32 %v110, %v111
    %v113 = vrot.slane %v112, 1
    %v114 = vadd.f32 %v112, %v113
    %s115 = vtos %v114
    %vm116 = vcmask 7168
    %v117 = vsel %vm116, %v105, 0.0
    %118 = vadd.xlane.f32.xlu0 %v117
    %v119 = vpop.xlane.xlu0 %118
    %v120 = vrot.slane %v119, 4
    %v121 = vadd.f32 %v119, %v120
    %v122 = vrot.slane %v121, 2
    %v123 = vadd.f32 %v121, %v122
    %v124 = vrot.slane %v123, 1
    %v125 = vadd.f32 %v123, %v124
    %s126 = vtos %v125
    %s127 = sadd.f32 %s115, %s126
    %s128 = smul.f32 %s127, 0.125
    %v129 = vstv %s128
    %vm130 = vcmask 0
    %131 = vst.msk [vmem:[#allocation6] sm:$0x1] %vm130, %v129
    %v133 = vlaneseq
    %v134 = vshrl.u32 %v133, 7
    %v135 = vsub.s32 0, %v134
    %v136 = vrot.slane %v35, %v135
    %v138 = vmul.f32 %v42, %v136
    %v139 = vmul.f32 %v51, %v136
    %v140 = vsel %vm36, %v138, 0.0
    %141 = vadd.xlane.f32.xlu0 %v140
    %v142 = vpop.xlane.xlu0 %141
    %v143 = vrcp.pop %v142
    %v144 = vmul.f32 1.0, %v143
    %v145 = vmul.f32 %v138, %v144
    %v146 = vsel %vm36, %v139, 0.0
    %147 = vadd.xlane.f32.xlu0 %v146
    %v148 = vpop.xlane.xlu0 %147
    %v149 = vrcp.pop %v148
    %v150 = vmul.f32 1.0, %v149
    %v151 = vmul.f32 %v139, %v150
    %vm152 = vcmp.gt.f32.partialorder %v34, 0.0
    %v153 = vsel %vm152, 1.0, %v34
    %v154 = vmul.f32 %v153, %v151
    %v155 = vmul.f32 %v153, %v145
    %v156 = vmul.f32 %v154, %v155
    %v157 = vsel %vm36, %v156, 0.0
    %158 = vadd.xlane.f32.xlu0 %v157
    %v159 = vpop.xlane.xlu0 %158
    %v160 = vadd.f32 %v159, 1e-09
    %v161 = vrcp.pop %v160
    %v162 = vmul.f32 1.0, %v161
    %v163 = vmul.f32 %v156, %v162
    %v164 = vrsqrt.pop %v163
    %v165 = vmul.f32 %v163, %v164
    %vm166 = vcmp.eq.f32.partialorder %v163, inf
    %v167 = vsel %vm166, %v163, %v165
    %vm168 = vcmp.eq.f32.partialorder %v163, 0.0
    %v169 = vand.u32 %v163, 2147483648
    %v170 = vsel %vm168, %v169, %v167
    %v171 = vsel %vm36, %v170, 0.0
    %172 = vadd.xlane.f32.xlu0 %v171
    %v173 = vpop.xlane.xlu0 %172
    %v174 = vadd.f32 %v173, 1e-09
    %v175 = vrcp.pop %v174
    %v176 = vmul.f32 1.0, %v175
    %v177 = vmul.f32 %v170, %v176
    %178 = vst.msk [vmem:[#allocation2] sm:$0xff] %vm36, %v177
    %s179 = smul.u32 0, 8
    loop: start=0, step=1, limit=8
    $region22: #{tpu_custom_call.1} parent=1 // loop_pre_header
      _
    $region23: #{tpu_custom_call.1} parent=1 // loop_header
      %s181 = sphi 0, %s185
      %p182 = scmp.ge.s32.totalorder %s181, 8
    $region24: #{tpu_custom_call.1} parent=1 // loop_header_branch
      %184 = sbr.rel (%p182) target = $region28
    $region25: #{tpu_custom_call.1} parent=1 // loop_body
      %s186 = sadd.s32 %s179, %s181
      %s187 = sld [smem:[#allocation5 + %s186]]
      %s188 = scalar_lea.vmem [#allocation2], %s181
      %s189 = scalar_lea.vmem %s8, %s187
      %s190 = scalar_lea.sflag [#allocation3], %s181
      %p192 = scmp.lt.u32.totalorder 1, 8
      %p193 = pneg %p192
      // Predicated region
      $region29: #{tpu_custom_call.1} parent=25 // pred_check
        _
      $region30: #{tpu_custom_call.1} parent=25 // pred_check_branch
        %195 = sbr.rel (%p192) target = $region32
      $region31: #{tpu_custom_call.1} parent=25 // pred_region
        %s210 = sand.u32 1, 7
        %p211 = scmp.eq.s32.totalorder %s210, 0
        %p212 = pneg %p211
        // Predicated region
        $region44: #{tpu_custom_call.1} parent=31 // pred_check
          _
        $region45: #{tpu_custom_call.1} parent=31 // pred_check_branch
          %214 = sbr.rel (%p211) target = $region47
        $region46: #{tpu_custom_call.1} parent=31 // pred_region
          %s215 = sand.u32 1, 7
          %s216 = ssub.s32 1, %s215
          %s217 = scalar_lea.vmem %s188, %s216 [#allocation2]
          %s218 = ssub.s32 1, %s215
          %s219 = scalar_lea.vmem %s189, %s218
          %s220 = sshllo.u32 0, %s215
          loop: start=0, step=1, limit=1
          $region48: #{tpu_custom_call.1} parent=46 // loop_pre_header
            _
          $region49: #{tpu_custom_call.1} parent=46 // loop_header
            %s222 = sphi 0, %s226
            %p223 = scmp.ge.s32.totalorder %s222, 1
            %s227 = sphi %s217, %s217
            %s228 = sphi %s219, %s219
          $region50: #{tpu_custom_call.1} parent=46 // loop_header_branch
            %225 = sbr.rel (%p223) target = $region54
          $region51: #{tpu_custom_call.1} parent=46 // loop_body
            %v229 = vld [vmem:[%s227] sm:%s220]
            %230 = vst [vmem:[%s228] sm:%s220] %v229
          $region52: #{tpu_custom_call.1} parent=46 // loop_footer
            %s226 = sadd.s32 1, %s222
          $region53: #{tpu_custom_call.1} parent=46 // loop_footer_branch
            %221 = sbr.rel target = $region49
          $region54: #{tpu_custom_call.1} parent=46 // loop_exit
            _
        $region47: #{tpu_custom_call.1} parent=31 // pred_fallthru
          _
      $region32: #{tpu_custom_call.1} parent=25 // pred_fallthru
        _
      // Predicated region
      $region33: #{tpu_custom_call.1} parent=25 // pred_check
        %p196 = pneg %p192
      $region34: #{tpu_custom_call.1} parent=25 // pred_check_branch
        %198 = sbr.rel (%p196) target = $region36
      $region35: #{tpu_custom_call.1} parent=25 // pred_region
        %s199 = sshllo.u32 0, 1
        loop: start=0, step=1, limit=1
        $region37: #{tpu_custom_call.1} parent=35 // loop_pre_header
          _
        $region38: #{tpu_custom_call.1} parent=35 // loop_header
          %s201 = sphi 0, %s205
          %p202 = scmp.ge.s32.totalorder %s201, 1
          %s206 = sphi %s188, %s188
          %s207 = sphi %s189, %s189
        $region39: #{tpu_custom_call.1} parent=35 // loop_header_branch
          %204 = sbr.rel (%p202) target = $region43
        $region40: #{tpu_custom_call.1} parent=35 // loop_body
          %v208 = vld [vmem:[%s206] sm:%s199]
          %209 = vst [vmem:[%s207] sm:%s199] %v208
        $region41: #{tpu_custom_call.1} parent=35 // loop_footer
          %s205 = sadd.s32 1, %s201
        $region42: #{tpu_custom_call.1} parent=35 // loop_footer_branch
          %200 = sbr.rel target = $region38
        $region43: #{tpu_custom_call.1} parent=35 // loop_exit
          _
      $region36: #{tpu_custom_call.1} parent=25 // pred_fallthru
        _
      // Predicated region
      $region55: #{tpu_custom_call.1} parent=25 // pred_check
        _
      $region56: #{tpu_custom_call.1} parent=25 // pred_check_branch
        %233 = sbr.rel (0) target = $region58
      $region57: #{tpu_custom_call.1} parent=25 // pred_region
        %234 = vsyncadd %s190, 16
      $region58: #{tpu_custom_call.1} parent=25 // pred_fallthru
        _
    $region26: #{tpu_custom_call.1} parent=1 // loop_footer
      %s185 = sadd.s32 1, %s181
    $region27: #{tpu_custom_call.1} parent=1 // loop_footer_branch
      %180 = sbr.rel target = $region23
    $region28: #{tpu_custom_call.1} parent=1 // loop_exit
      _
    loop: start=0, step=1, limit=8
    $region59: #{tpu_custom_call.1} parent=1 // loop_pre_header
      _
    $region60: #{tpu_custom_call.1} parent=1 // loop_header
      %s236 = sphi 0, %s240
      %p237 = scmp.ge.s32.totalorder %s236, 8
    $region61: #{tpu_custom_call.1} parent=1 // loop_header_branch
      %239 = sbr.rel (%p237) target = $region65
    $region62: #{tpu_custom_call.1} parent=1 // loop_body
      %s241 = sadd.s32 %s179, %s236
      %s242 = sld [smem:[#allocation5 + %s241]]
      %s243 = scalar_lea.sflag [#allocation3], %s236
      %s244 = smul.u32 1, 1
      %s245 = sshll.u32 %s244, 4
      %246 = dma.done %s243, %s245
    $region63: #{tpu_custom_call.1} parent=1 // loop_footer
      %s240 = sadd.s32 1, %s236
    $region64: #{tpu_custom_call.1} parent=1 // loop_footer_branch
      %235 = sbr.rel target = $region60
    $region65: #{tpu_custom_call.1} parent=1 // loop_exit
      _
    // Predicated region
    $region66: #{tpu_custom_call.1} parent=1 // pred_check
      _
    $region67: #{tpu_custom_call.1} parent=1 // pred_check_branch
      %248 = sbr.rel (0) target = $region69
    $region68: #{tpu_custom_call.1} parent=1 // pred_region
      %s250 = ssub.s32 16, 16
      %251 = vsyncadd [#allocation7], %s250
      %s253 = sshll.u32 [#allocation6], 4
      %s254 = int_to_ptr.vmem [resolvable:$true] %s253
      %256 = dma.vmem_to_hbm [thread:$0]  %s254, 16, %s7, [#allocation7]
    $region69: #{tpu_custom_call.1} parent=1 // pred_fallthru
      _
    // Predicated region
    $region70: #{tpu_custom_call.1} parent=1 // pred_check
      _
    $region71: #{tpu_custom_call.1} parent=1 // pred_check_branch
      %258 = sbr.rel (0) target = $region73
    $region72: #{tpu_custom_call.1} parent=1 // pred_region
      %259 = dma.done [#allocation7], 16
    $region73: #{tpu_custom_call.1} parent=1 // pred_fallthru
      _
    %260 = vsyncpa [#allocation7], 1
  %261 = vsyncmov [#allocation3]
  %s262 = vpop.sfrf %261
  %p263 = scmp.eq.s32.totalorder %s262, 0
  %p264 = pneg %p263
  %266 = shalt.err (%p264)
  %s267 = scalar_lea.sflag [#allocation3], 1
  %268 = vsyncmov %s267
  %s269 = vpop.sfrf %268
  %p270 = scmp.eq.s32.totalorder %s269, 0
  %p271 = pneg %p270
  %273 = shalt.err (%p271)
  %s274 = scalar_lea.sflag [#allocation3], 2
  %275 = vsyncmov %s274
  %s276 = vpop.sfrf %275
  %p277 = scmp.eq.s32.totalorder %s276, 0
  %p278 = pneg %p277
  %280 = shalt.err (%p278)
  %s281 = scalar_lea.sflag [#allocation3], 3
  %282 = vsyncmov %s281
  %s283 = vpop.sfrf %282
  %p284 = scmp.eq.s32.totalorder %s283, 0
  %p285 = pneg %p284
  %287 = shalt.err (%p285)
  %s288 = scalar_lea.sflag [#allocation3], 4
  %289 = vsyncmov %s288
  %s290 = vpop.sfrf %289
  %p291 = scmp.eq.s32.totalorder %s290, 0
  %p292 = pneg %p291
  %294 = shalt.err (%p292)
  %s295 = scalar_lea.sflag [#allocation3], 5
  %296 = vsyncmov %s295
  %s297 = vpop.sfrf %296
  %p298 = scmp.eq.s32.totalorder %s297, 0
  %p299 = pneg %p298
  %301 = shalt.err (%p299)
  %s302 = scalar_lea.sflag [#allocation3], 6
  %303 = vsyncmov %s302
  %s304 = vpop.sfrf %303
  %p305 = scmp.eq.s32.totalorder %s304, 0
  %p306 = pneg %p305
  %308 = shalt.err (%p306)
  %s309 = scalar_lea.sflag [#allocation3], 7
  %310 = vsyncmov %s309
  %s311 = vpop.sfrf %310
  %p312 = scmp.eq.s32.totalorder %s311, 0
  %p313 = pneg %p312
  %315 = shalt.err (%p313)

</llo_original>
